<compile_context>
chip_gen: v6e
topology: v6e:2x2x1
jax: 0.10.0
libtpu: 0.0.40
codegen_flags: <defaults>
</compile_context>

<pallas_src>
import functools

import jax
import jax.numpy as jnp
from jax.experimental import pallas as pl
from jax.experimental.pallas import tpu as pltpu


def _round_up(x: int, m: int) -> int:
    return (x + m - 1) // m * m


def _cdiv(a: int, b: int) -> int:
    return (a + b - 1) // b


def actor_sac_kernel(s_ref, w1_ref, b1_ref, w2_ref, b2_ref, w3_ref, b3_ref,
                     out_ref, *, max_action):
    # Layer 1: Linear (bf16 MXU operands, f32 accumulate) + bias + ReLU (f32 VPU).
    h = jnp.dot(s_ref[...], w1_ref[...], preferred_element_type=jnp.float32)
    h = jnp.maximum(h + b1_ref[...], 0.0)

    # Layer 2: Linear, no activation (build_mlp strips the final ReLU).
    h = jnp.dot(h.astype(w2_ref.dtype), w2_ref[...],
                preferred_element_type=jnp.float32)
    h = h + b2_ref[...]

    # Mean head (already sliced to the mean half outside the kernel).
    m = jnp.dot(h.astype(w3_ref.dtype), w3_ref[...],
                preferred_element_type=jnp.float32)
    m = m + b3_ref[...]

    t = jnp.tanh(m)                      # f32 EUP
    if max_action != 1.0:                # static Python float -> trace-time branch
        t = t * max_action
    out_ref[...] = t.astype(out_ref.dtype)   # bf16 store: halves vst + HBM writeback


def _choose_tile_b(batch: int, cap: int = 2048) -> int:
    """Balanced batch tile: multiple of 16, bounded padding, >=2 steps if possible."""
    b16 = _round_up(max(batch, 1), 16)
    if b16 >= 32:
        # Guarantee at least 2 grid steps so v7x can shard across its 2 TCs.
        cap = max(16, min(cap, b16 // 2))
    n_tiles = _cdiv(b16, cap)
    return _round_up(_cdiv(b16, n_tiles), 16)


@functools.lru_cache(maxsize=None)
def _build_actor_call(batch_padded, tile_b, state_dim, h0, h1, action_dim,
                      max_action, compute_dtype_name, out_dtype_name):
    compute_dt = jnp.dtype(compute_dtype_name)
    out_dt = jnp.dtype(out_dtype_name)
    grid = (batch_padded // tile_b,)

    kernel = functools.partial(actor_sac_kernel, max_action=max_action)

    def weight_spec(shape):
        # Constant index_map -> VMEM-resident across the whole grid.
        return pl.BlockSpec(shape, lambda i: (0, 0))

    flops = 2 * batch_padded * (state_dim * h0 + h0 * h1 + h1 * action_dim)
    transcendentals = batch_padded * action_dim  # tanh
    bytes_accessed = (
        batch_padded * state_dim * compute_dt.itemsize                    # state
        + (state_dim * h0 + h0 * h1 + h1 * action_dim) * compute_dt.itemsize  # weights
        + (h0 + h1 + action_dim) * 4                                       # f32 biases
        + batch_padded * action_dim * out_dt.itemsize)                     # output

    return pl.pallas_call(
        kernel,
        out_shape=jax.ShapeDtypeStruct((batch_padded, action_dim), out_dt),
        grid_spec=pltpu.PrefetchScalarGridSpec(
            num_scalar_prefetch=0,
            grid=grid,
            in_specs=[
                pl.BlockSpec((tile_b, state_dim), lambda i: (i, 0)),  # state tile
                weight_spec((state_dim, h0)),                         # w1
                weight_spec((1, h0)),                                 # b1
                weight_spec((h0, h1)),                                # w2
                weight_spec((1, h1)),                                 # b2
                weight_spec((h1, action_dim)),                        # w3 (mean half)
                weight_spec((1, action_dim)),                         # b3 (mean half)
            ],
            # Unpadded output: last block dim == full array dim (legal); bf16.
            out_specs=pl.BlockSpec((tile_b, action_dim), lambda i: (i, 0)),
        ),
        compiler_params=pltpu.CompilerParams(
            dimension_semantics=("parallel",)),
        cost_estimate=pl.CostEstimate(
            flops=flops,
            transcendentals=transcendentals,
            bytes_accessed=bytes_accessed),
    )


def actor_sac_forward(state, params, *, action_dim, max_action=1.0,
                      compute_dtype=jnp.bfloat16, out_dtype=jnp.bfloat16):
    w1, b1, w2, b2, w3, b3 = params
    batch, state_dim = state.shape
    h0 = w1.shape[1]
    h1 = w2.shape[1]

    # torch `.chunk(2, dim=-1)[0]` is the mean: first action_dim output columns.
    w3m = w3[:, :action_dim]
    b3m = b3[:, :action_dim]

    # Balanced batch tiling (multiple of 16; >=2 grid steps when batch >= 32).
    tile_b = _choose_tile_b(batch)
    batch_padded = _round_up(batch, tile_b)
    if batch_padded != batch:
        state = jnp.pad(state, ((0, batch_padded - batch), (0, 0)))

    cdt = jnp.dtype(compute_dtype)
    odt = jnp.dtype(out_dtype)
    s = state.astype(cdt)
    w1c = w1.astype(cdt)
    w2c = w2.astype(cdt)
    w3c = w3m.astype(cdt)
    b1f = b1.astype(jnp.float32)
    b2f = b2.astype(jnp.float32)
    b3f = b3m.astype(jnp.float32)

    call = _build_actor_call(batch_padded, tile_b, state_dim, h0, h1, action_dim,
                             float(max_action), cdt.name, odt.name)
    out = call(s, w1c, b1f, w2c, b2f, w3c, b3f)
    return out[:batch]   # padded rows are garbage; sliced off here


def init_params(key, state_dim, net_dims, action_dim):
    """Deterministic synthetic init (shapes match the PyTorch module)."""
    dims = [state_dim, *net_dims]
    keys = jax.random.split(key, 2 * len(dims))
    params = []
    for i in range(len(dims) - 1):
        fan_in, fan_out = dims[i], dims[i + 1]
        w = jax.random.normal(keys[2 * i], (fan_in, fan_out),
                              jnp.float32) / jnp.sqrt(fan_in)
        b = jnp.zeros((1, fan_out), jnp.float32)
        params.extend([w, b])
    # mean_variance head (orthogonal std=0.01 in torch; small gaussian here)
    w3 = 0.01 * jax.random.normal(keys[-1], (net_dims[-1], 2 * action_dim),
                                  jnp.float32)
    b3 = jnp.zeros((1, 2 * action_dim), jnp.float32)
    params.extend([w3, b3])
    return tuple(params)


def reference_forward_f32(state, params, *, action_dim, max_action=1.0):
    w1, b1, w2, b2, w3, b3 = params
    h = jnp.maximum(state @ w1 + b1, 0.0)
    h = h @ w2 + b2
    mv = h @ w3 + b3
    return jnp.tanh(mv[:, :action_dim]) * max_action


def reference_forward_bf16(state, params, *, action_dim, max_action=1.0):
    """Same math as the kernel: bf16 matmul operands, f32 accumulate/elementwise."""
    w1, b1, w2, b2, w3, b3 = params
    bf = jnp.bfloat16
    h = jnp.dot(state.astype(bf), w1.astype(bf),
                preferred_element_type=jnp.float32) + b1
    h = jnp.maximum(h, 0.0)
    h = jnp.dot(h.astype(bf), w2.astype(bf),
                preferred_element_type=jnp.float32) + b2
    mv = jnp.dot(h.astype(bf), w3.astype(bf),
                 preferred_element_type=jnp.float32) + b3
    return jnp.tanh(mv[:, :action_dim]) * max_action


if __name__ == "__main__":
    # Small shapes consistent with the module.
    state_dim = 16
    net_dims = [32, 32]
    action_dim = 4
    max_action = 1.0

    key = jax.random.PRNGKey(0)
    k_state, k_params = jax.random.split(key)
    params = init_params(k_params, state_dim, net_dims, action_dim)

    forward = jax.jit(functools.partial(
        actor_sac_forward, action_dim=action_dim, max_action=max_action))

    # batch=8 -> single grid step; batch=48 -> 2 grid steps with padded rows.
    for batch in (8, 48):
        state = jax.random.normal(jax.random.fold_in(k_state, batch),
                                  (batch, state_dim), jnp.float32)
        out = jax.block_until_ready(forward(state, params))
        assert out.shape == (batch, action_dim)
        out_f32 = out.astype(jnp.float32)

        # Same-math reference (bf16 matmul operands, f32 accumulate): tight-ish
        # tolerance accounting for the final bf16 output quantization.
        ref_bf16 = reference_forward_bf16(state, params, action_dim=action_dim,
                                          max_action=max_action)
        assert jnp.allclose(out_f32, ref_bf16, atol=2e-2, rtol=2e-2)

        # Full-f32 reference: loose tolerance (bf16 operands + bf16 output).
        ref_f32 = reference_forward_f32(state, params, action_dim=action_dim,
                                        max_action=max_action)
        assert jnp.allclose(out_f32, ref_f32, atol=5e-2, rtol=5e-2)

    # TODO(synk): get_action()/sample() (Normal rsample + tanh-squash log_prob)
    # are stochastic inference paths, not part of forward(); not implemented.
    print("KERNEL_OK")
</pallas_src>

<mosaic_0001>
module attributes {stable_mosaic.version = 11 : i64} {
  func.func @actor_sac_kernel(%arg0: i32, %arg1: memref<16x16xbf16, #tpu.memory_space<vmem>>, %arg2: memref<16x32xbf16, #tpu.memory_space<vmem>>, %arg3: memref<1x32xf32, #tpu.memory_space<vmem>>, %arg4: memref<32x32xbf16, #tpu.memory_space<vmem>>, %arg5: memref<1x32xf32, #tpu.memory_space<vmem>>, %arg6: memref<32x4xbf16, #tpu.memory_space<vmem>>, %arg7: memref<1x4xf32, #tpu.memory_space<vmem>>, %arg8: memref<16x4xbf16, #tpu.memory_space<vmem>>) attributes {dimension_semantics = [#tpu.dimension_semantics<parallel>], iteration_bounds = array<i64: 1>, scalar_prefetch = 0 : i64, scratch_operands = 0 : i64, tpu.core_type = #tpu.core_type<tc>, window_params = [{transform_indices = @transform_0, window_bounds = array<i64: 16, 16>}, {pipeline_mode = #tpu.pipeline_mode<synchronous>, transform_indices = @transform_1, window_bounds = array<i64: 16, 32>}, {pipeline_mode = #tpu.pipeline_mode<synchronous>, transform_indices = @transform_2, window_bounds = array<i64: 1, 32>}, {pipeline_mode = #tpu.pipeline_mode<synchronous>, transform_indices = @transform_3, window_bounds = array<i64: 32, 32>}, {pipeline_mode = #tpu.pipeline_mode<synchronous>, transform_indices = @transform_4, window_bounds = array<i64: 1, 32>}, {pipeline_mode = #tpu.pipeline_mode<synchronous>, transform_indices = @transform_5, window_bounds = array<i64: 32, 4>}, {pipeline_mode = #tpu.pipeline_mode<synchronous>, transform_indices = @transform_6, window_bounds = array<i64: 1, 4>}, {transform_indices = @transform_7, window_bounds = array<i64: 16, 4>}]} {
    %c0 = arith.constant 0 : index
    %c0_0 = arith.constant 0 : index
    %0 = vector.load %arg1[%c0, %c0_0] : memref<16x16xbf16, #tpu.memory_space<vmem>>, vector<16x16xbf16>
    %c0_1 = arith.constant 0 : index
    %c0_2 = arith.constant 0 : index
    %1 = vector.load %arg2[%c0_1, %c0_2] : memref<16x32xbf16, #tpu.memory_space<vmem>>, vector<16x32xbf16>
    %cst = arith.constant dense<0.000000e+00> : vector<16x32xf32>
    %2 = tpu.matmul %0, %1, %cst {dimension_numbers = #tpu.dot_dimension_numbers<[1], [0], [0], [1], [0, 0, 1, 1], [], []>} : vector<16x16xbf16>, vector<16x32xbf16>, vector<16x32xf32> -> vector<16x32xf32>
    %c0_3 = arith.constant 0 : index
    %c0_4 = arith.constant 0 : index
    %3 = vector.load %arg3[%c0_3, %c0_4] : memref<1x32xf32, #tpu.memory_space<vmem>>, vector<1x32xf32>
    %4 = vector.broadcast %3 : vector<1x32xf32> to vector<16x32xf32>
    %5 = arith.addf %2, %4 : vector<16x32xf32>
    %cst_5 = arith.constant 0.000000e+00 : f32
    %6 = vector.broadcast %cst_5 : f32 to vector<16x32xf32>
    %7 = arith.maximumf %5, %6 : vector<16x32xf32>
    %8 = arith.truncf %7 : vector<16x32xf32> to vector<16x32xbf16>
    %c0_6 = arith.constant 0 : index
    %c0_7 = arith.constant 0 : index
    %9 = vector.load %arg4[%c0_6, %c0_7] : memref<32x32xbf16, #tpu.memory_space<vmem>>, vector<32x32xbf16>
    %cst_8 = arith.constant dense<0.000000e+00> : vector<16x32xf32>
    %10 = tpu.matmul %8, %9, %cst_8 {dimension_numbers = #tpu.dot_dimension_numbers<[1], [0], [0], [1], [0, 0, 1, 1], [], []>} : vector<16x32xbf16>, vector<32x32xbf16>, vector<16x32xf32> -> vector<16x32xf32>
    %c0_9 = arith.constant 0 : index
    %c0_10 = arith.constant 0 : index
    %11 = vector.load %arg5[%c0_9, %c0_10] : memref<1x32xf32, #tpu.memory_space<vmem>>, vector<1x32xf32>
    %12 = vector.broadcast %11 : vector<1x32xf32> to vector<16x32xf32>
    %13 = arith.addf %10, %12 : vector<16x32xf32>
    %14 = arith.truncf %13 : vector<16x32xf32> to vector<16x32xbf16>
    %c0_11 = arith.constant 0 : index
    %c0_12 = arith.constant 0 : index
    %15 = vector.load %arg6[%c0_11, %c0_12] : memref<32x4xbf16, #tpu.memory_space<vmem>>, vector<32x4xbf16>
    %cst_13 = arith.constant dense<0.000000e+00> : vector<16x4xf32>
    %16 = tpu.matmul %14, %15, %cst_13 {dimension_numbers = #tpu.dot_dimension_numbers<[1], [0], [0], [1], [0, 0, 1, 1], [], []>} : vector<16x32xbf16>, vector<32x4xbf16>, vector<16x4xf32> -> vector<16x4xf32>
    %c0_14 = arith.constant 0 : index
    %c0_15 = arith.constant 0 : index
    %17 = vector.load %arg7[%c0_14, %c0_15] : memref<1x4xf32, #tpu.memory_space<vmem>>, vector<1x4xf32>
    %18 = vector.broadcast %17 : vector<1x4xf32> to vector<16x4xf32>
    %19 = arith.addf %16, %18 : vector<16x4xf32>
    %20 = math.tanh %19 : vector<16x4xf32>
    %21 = arith.truncf %20 : vector<16x4xf32> to vector<16x4xbf16>
    %c0_16 = arith.constant 0 : index
    %c0_17 = arith.constant 0 : index
    %22 = vector.load %arg8[%c0_16, %c0_17] : memref<16x4xbf16, #tpu.memory_space<vmem>>, vector<16x4xbf16>
    tpu.vector_store %arg8[%c0_16, %c0_17], %21 {strides = array<i32>} : memref<16x4xbf16, #tpu.memory_space<vmem>>, vector<16x4xbf16>,
    return
  }
  func.func @transform_0(%arg0: i32) -> (i32, i32) {
    %c0_i32 = arith.constant 0 : i32
    %c0_i32_0 = arith.constant 0 : i32
    return %arg0, %c0_i32 : i32, i32
  }
  func.func @transform_1(%arg0: i32) -> (i32, i32) {
    %c0_i32 = arith.constant 0 : i32
    %c0_i32_0 = arith.constant 0 : i32
    %c0_i32_1 = arith.constant 0 : i32
    return %c0_i32, %c0_i32_0 : i32, i32
  }
  func.func @transform_2(%arg0: i32) -> (i32, i32) {
    %c0_i32 = arith.constant 0 : i32
    %c0_i32_0 = arith.constant 0 : i32
    %c0_i32_1 = arith.constant 0 : i32
    return %c0_i32, %c0_i32_0 : i32, i32
  }
  func.func @transform_3(%arg0: i32) -> (i32, i32) {
    %c0_i32 = arith.constant 0 : i32
    %c0_i32_0 = arith.constant 0 : i32
    %c0_i32_1 = arith.constant 0 : i32
    return %c0_i32, %c0_i32_0 : i32, i32
  }
  func.func @transform_4(%arg0: i32) -> (i32, i32) {
    %c0_i32 = arith.constant 0 : i32
    %c0_i32_0 = arith.constant 0 : i32
    %c0_i32_1 = arith.constant 0 : i32
    return %c0_i32, %c0_i32_0 : i32, i32
  }
  func.func @transform_5(%arg0: i32) -> (i32, i32) {
    %c0_i32 = arith.constant 0 : i32
    %c0_i32_0 = arith.constant 0 : i32
    %c0_i32_1 = arith.constant 0 : i32
    return %c0_i32, %c0_i32_0 : i32, i32
  }
  func.func @transform_6(%arg0: i32) -> (i32, i32) {
    %c0_i32 = arith.constant 0 : i32
    %c0_i32_0 = arith.constant 0 : i32
    %c0_i32_1 = arith.constant 0 : i32
    return %c0_i32, %c0_i32_0 : i32, i32
  }
  func.func @transform_7(%arg0: i32) -> (i32, i32) {
    %c0_i32 = arith.constant 0 : i32
    %c0_i32_0 = arith.constant 0 : i32
    return %arg0, %c0_i32 : i32, i32
  }
}

</mosaic_0001>

<llo_original>
// kernel: actor_sac_forward.1
$region0: #{actor_sac_forward.1}
  #allocation0 [shape = 'u32[]', space=smem, size = 0x4, offset = 0x4, fixed_abs, tag = 'smem constant byte address 0x4 - core index']
  #allocation1 [shape = 'u32[144,128]{1,0:T(1,128)}', space=vmem, size = 0x12000, scoped, tag = 'internal scratch']
  %s0 = inlined_call_operand.vmem [shape: bf16[16,16], index: 0, kind: input, shape index: {}]
  %s1 = inlined_call_operand.vmem [shape: bf16[16,32], index: 1, kind: input, shape index: {}]
  %s2 = inlined_call_operand.vmem [shape: f32[1,32], index: 2, kind: input, shape index: {}]
  %s3 = inlined_call_operand.vmem [shape: bf16[32,32], index: 3, kind: input, shape index: {}]
  %s4 = inlined_call_operand.vmem [shape: f32[1,32], index: 4, kind: input, shape index: {}]
  %s5 = inlined_call_operand.vmem [shape: bf16[32,4], index: 5, kind: input, shape index: {}]
  %s6 = inlined_call_operand.vmem [shape: f32[1,4], index: 6, kind: input, shape index: {}]
  %s7 = inlined_call_operand.vmem [shape: bf16[16,4], index: 7, kind: output, shape index: {}]
  %s8 = sld [smem:[#allocation0]]
  $region38: #{actor_sac_forward.1} parent=0
    _
  %s10 = ssub.s32 1, %s8
  %s11 = scalar_select 0, %s10, %s8
  // Predicated region
  $region2: #{actor_sac_forward.1} parent=0 // pred_check
    _
  $region3: #{actor_sac_forward.1} parent=0 // pred_check_branch
    %13 = sbr.rel (0) target = $region5
  $region4: #{actor_sac_forward.1} parent=0 // pred_region
    _
  $region5: #{actor_sac_forward.1} parent=0 // pred_fallthru
    _
  // Predicated region
  $region6: #{actor_sac_forward.1} parent=0 // pred_check
    _
  $region7: #{actor_sac_forward.1} parent=0 // pred_check_branch
    %15 = sbr.rel (0) target = $region9
  $region8: #{actor_sac_forward.1} parent=0 // pred_region
    _
  $region9: #{actor_sac_forward.1} parent=0 // pred_fallthru
    _
  // Predicated region
  $region10: #{actor_sac_forward.1} parent=0 // pred_check
    _
  $region11: #{actor_sac_forward.1} parent=0 // pred_check_branch
    %17 = sbr.rel (0) target = $region13
  $region12: #{actor_sac_forward.1} parent=0 // pred_region
    _
  $region13: #{actor_sac_forward.1} parent=0 // pred_fallthru
    _
  // Predicated region
  $region14: #{actor_sac_forward.1} parent=0 // pred_check
    _
  $region15: #{actor_sac_forward.1} parent=0 // pred_check_branch
    %19 = sbr.rel (0) target = $region17
  $region16: #{actor_sac_forward.1} parent=0 // pred_region
    _
  $region17: #{actor_sac_forward.1} parent=0 // pred_fallthru
    _
  // Predicated region
  $region18: #{actor_sac_forward.1} parent=0 // pred_check
    _
  $region19: #{actor_sac_forward.1} parent=0 // pred_check_branch
    %21 = sbr.rel (0) target = $region21
  $region20: #{actor_sac_forward.1} parent=0 // pred_region
    _
  $region21: #{actor_sac_forward.1} parent=0 // pred_fallthru
    _
  // Predicated region
  $region22: #{actor_sac_forward.1} parent=0 // pred_check
    _
  $region23: #{actor_sac_forward.1} parent=0 // pred_check_branch
    %23 = sbr.rel (0) target = $region25
  $region24: #{actor_sac_forward.1} parent=0 // pred_region
    _
  $region25: #{actor_sac_forward.1} parent=0 // pred_fallthru
    _
  // Predicated region
  $region26: #{actor_sac_forward.1} parent=0 // pred_check
    _
  $region27: #{actor_sac_forward.1} parent=0 // pred_check_branch
    %25 = sbr.rel (0) target = $region29
  $region28: #{actor_sac_forward.1} parent=0 // pred_region
    _
  $region29: #{actor_sac_forward.1} parent=0 // pred_fallthru
    _
  %v27 = vld [vmem:[%s0] sm:$0xf]
  %v28 = vld [vmem:[%s0 + $0x4] sm:$0xf]
  %v29 = vld [vmem:[%s1] sm:$0xf]
  %v30 = vld [vmem:[%s1 + $0x4] sm:$0xf]
  %v31 = vld [vmem:[%s2] sm:$0x1]
  %v33 = vlaneseq
  %v34 = vshrl.u32 %v33, 7
  %v35 = vsub.s32 0, %v34
  %v36 = vrot.slane %v31, %v35
  %v40 = vunpack.c.l.b16 %v27
  %v41 = vunpack.c.l.b16 %v28
  %v42 = vpack.c.b16 %v41, %v40
  %v45 = vunpack.c.l.b16 %v29
  %v46 = vunpack.c.l.b16 %v30
  %v47 = vpack.c.b16 %v46, %v45
  %vm49 = vcmask 130048
  %v51 = vsel %vm49, %v42, 0
  %53 = vmatprep.subr.bf16.mxu0 0
  %54 = vmatpush1.bf16.msra.mxu0 0
  %55 = vmatprep.subr.bf16.mxu0 0
  %56 = vmatpush1.bf16.msra.mxu0 0
  %57 = vmatprep.subr.bf16.mxu0 0
  %58 = vmatpush1.bf16.msra.mxu0 0
  %59 = vmatprep.subr.bf16.mxu0 0
  %60 = vmatpush1.bf16.msra.mxu0 0
  %61 = vmatprep.subr.bf16.mxu0 0
  %62 = vmatpush1.bf16.msra.mxu0 0
  %63 = vmatprep.subr.bf16.mxu0 0
  %64 = vmatpush1.bf16.msra.mxu0 0
  %65 = vmatprep.subr.bf16.mxu0 0
  %66 = vmatpush1.bf16.msra.mxu0 0
  %67 = vmatprep.subr.bf16.mxu0 0
  %68 = vmatpush1.bf16.msra.mxu0 %v47
  %69 = vmatprep.subr.bf16.mxu0 0
  %70 = vmatpush2.bf16.msra.mxu0 0
  %71 = vmatprep.subr.bf16.mxu0 0
  %72 = vmatpush2.bf16.msra.mxu0 0
  %73 = vmatprep.subr.bf16.mxu0 0
  %74 = vmatpush2.bf16.msra.mxu0 0
  %75 = vmatprep.subr.bf16.mxu0 0
  %76 = vmatpush2.bf16.msra.mxu0 0
  %77 = vmatprep.subr.bf16.mxu0 0
  %78 = vmatpush2.bf16.msra.mxu0 0
  %79 = vmatprep.subr.bf16.mxu0 0
  %80 = vmatpush2.bf16.msra.mxu0 0
  %81 = vmatprep.subr.bf16.mxu0 0
  %82 = vmatpush2.bf16.msra.mxu0 0
  %83 = vmatprep.subr.bf16.mxu0 0
  %84 = vmatpush2.bf16.msra.mxu0 0
  %85 = vmatprep.mubr.bf16.mxu0 0
  %86 = vmatmul.mubr.bf16.gmra.mxu0 %v51
  %v87 = vpop.f32.mrf.mxu0
  %v88 = vadd.f32 %v36, %v87
  %v89 = vpop.f32.mrf.mxu0
  %v90 = vpop.f32.mrf.mxu0
  %v91 = vadd.f32 %v36, %v90
  %v92 = vpop.f32.mrf.mxu0
  %93 = vdwg.mxu0
  %v94 = vmax.f32 %v88, 0.0
  %v95 = vmax.f32 %v91, 0.0
  %v96 = vpack.c.bf16 %v95, %v94
  %v97 = vld [vmem:[%s3] sm:$0xf]
  %v98 = vld [vmem:[%s3 + $0x4] sm:$0xf]
  %v99 = vld [vmem:[%s3 + $0x8] sm:$0xf]
  %v100 = vld [vmem:[%s3 + $0xc] sm:$0xf]
  %v101 = vld [vmem:[%s4] sm:$0x1]
  %v103 = vlaneseq
  %v104 = vshrl.u32 %v103, 7
  %v105 = vsub.s32 0, %v104
  %v106 = vrot.slane %v101, %v105
  %v112 = vunpack.c.l.b16 %v97
  %v113 = vunpack.c.l.b16 %v98
  %v114 = vunpack.c.l.b16 %v99
  %v115 = vunpack.c.l.b16 %v100
  %v116 = vpack.c.b16 %v113, %v112
  %v117 = vpack.c.b16 %v115, %v114
  %vm120 = vcmask 261120
  %v122 = vsel %vm120, %v96, 0
  %124 = vmatprep.subr.bf16.mxu0 0
  %125 = vmatpush1.bf16.msra.mxu0 0
  %126 = vmatprep.subr.bf16.mxu0 0
  %127 = vmatpush1.bf16.msra.mxu0 0
  %128 = vmatprep.subr.bf16.mxu0 0
  %129 = vmatpush1.bf16.msra.mxu0 0
  %130 = vmatprep.subr.bf16.mxu0 0
  %131 = vmatpush1.bf16.msra.mxu0 0
  %132 = vmatprep.subr.bf16.mxu0 0
  %133 = vmatpush1.bf16.msra.mxu0 0
  %134 = vmatprep.subr.bf16.mxu0 0
  %135 = vmatpush1.bf16.msra.mxu0 0
  %136 = vmatprep.subr.bf16.mxu0 0
  %137 = vmatpush1.bf16.msra.mxu0 %v117
  %138 = vmatprep.subr.bf16.mxu0 0
  %139 = vmatpush1.bf16.msra.mxu0 %v116
  %140 = vmatprep.subr.bf16.mxu0 0
  %141 = vmatpush2.bf16.msra.mxu0 0
  %142 = vmatprep.subr.bf16.mxu0 0
  %143 = vmatpush2.bf16.msra.mxu0 0
  %144 = vmatprep.subr.bf16.mxu0 0
  %145 = vmatpush2.bf16.msra.mxu0 0
  %146 = vmatprep.subr.bf16.mxu0 0
  %147 = vmatpush2.bf16.msra.mxu0 0
  %148 = vmatprep.subr.bf16.mxu0 0
  %149 = vmatpush2.bf16.msra.mxu0 0
  %150 = vmatprep.subr.bf16.mxu0 0
  %151 = vmatpush2.bf16.msra.mxu0 0
  %152 = vmatprep.subr.bf16.mxu0 0
  %153 = vmatpush2.bf16.msra.mxu0 0
  %154 = vmatprep.subr.bf16.mxu0 0
  %155 = vmatpush2.bf16.msra.mxu0 0
  %156 = vmatprep.mubr.bf16.mxu0 0
  %157 = vmatmul.mubr.bf16.gmra.mxu0 %v122
  %v158 = vpop.f32.mrf.mxu0
  %v159 = vadd.f32 %v106, %v158
  %v160 = vpop.f32.mrf.mxu0
  %v161 = vpop.f32.mrf.mxu0
  %v162 = vadd.f32 %v106, %v161
  %v163 = vpop.f32.mrf.mxu0
  %164 = vdwg.mxu0
  %v165 = vpack.c.bf16 %v162, %v159
  %v166 = vld [vmem:[%s5] sm:$0xf]
  %v167 = vld [vmem:[%s5 + $0x4] sm:$0xf]
  %v168 = vld [vmem:[%s5 + $0x8] sm:$0xf]
  %v169 = vld [vmem:[%s5 + $0xc] sm:$0xf]
  %v170 = vld [vmem:[%s6] sm:$0x1]
  %v172 = vlaneseq
  %v173 = vshrl.u32 %v172, 7
  %v174 = vsub.s32 0, %v173
  %v175 = vrot.slane %v170, %v174
  %v181 = vunpack.c.l.b16 %v166
  %v182 = vunpack.c.l.b16 %v167
  %v183 = vunpack.c.l.b16 %v168
  %v184 = vunpack.c.l.b16 %v169
  %v185 = vpack.c.b16 %v182, %v181
  %v186 = vpack.c.b16 %v184, %v183
  %v190 = vsel %vm120, %v165, 0
  %192 = vmatprep.subr.bf16.mxu0 0
  %193 = vmatpush1.bf16.msra.mxu0 0
  %194 = vmatprep.subr.bf16.mxu0 0
  %195 = vmatpush1.bf16.msra.mxu0 0
  %196 = vmatprep.subr.bf16.mxu0 0
  %197 = vmatpush1.bf16.msra.mxu0 0
  %198 = vmatprep.subr.bf16.mxu0 0
  %199 = vmatpush1.bf16.msra.mxu0 0
  %200 = vmatprep.subr.bf16.mxu0 0
  %201 = vmatpush1.bf16.msra.mxu0 0
  %202 = vmatprep.subr.bf16.mxu0 0
  %203 = vmatpush1.bf16.msra.mxu0 0
  %204 = vmatprep.subr.bf16.mxu0 0
  %205 = vmatpush1.bf16.msra.mxu0 %v186
  %206 = vmatprep.subr.bf16.mxu0 0
  %207 = vmatpush1.bf16.msra.mxu0 %v185
  %208 = vmatprep.subr.bf16.mxu0 0
  %209 = vmatpush2.bf16.msra.mxu0 0
  %210 = vmatprep.subr.bf16.mxu0 0
  %211 = vmatpush2.bf16.msra.mxu0 0
  %212 = vmatprep.subr.bf16.mxu0 0
  %213 = vmatpush2.bf16.msra.mxu0 0
  %214 = vmatprep.subr.bf16.mxu0 0
  %215 = vmatpush2.bf16.msra.mxu0 0
  %216 = vmatprep.subr.bf16.mxu0 0
  %217 = vmatpush2.bf16.msra.mxu0 0
  %218 = vmatprep.subr.bf16.mxu0 0
  %219 = vmatpush2.bf16.msra.mxu0 0
  %220 = vmatprep.subr.bf16.mxu0 0
  %221 = vmatpush2.bf16.msra.mxu0 0
  %222 = vmatprep.subr.bf16.mxu0 0
  %223 = vmatpush2.bf16.msra.mxu0 0
  %224 = vmatprep.mubr.bf16.mxu0 0
  %225 = vmatmul.mubr.bf16.gmra.mxu0 %v190
  %v226 = vpop.f32.mrf.mxu0
  %v227 = vadd.f32 %v175, %v226
  %v228 = vpop.f32.mrf.mxu0
  %v229 = vpop.f32.mrf.mxu0
  %v230 = vadd.f32 %v175, %v229
  %v231 = vpop.f32.mrf.mxu0
  %232 = vdwg.mxu0
  %v233 = vtanh.pop %v227
  %v234 = vtanh.pop %v230
  %v235 = vpack.c.bf16 %v234, %v233
  %v237 = vunpack.c.l.b16 %v235
  %v238 = vunpack.c.h.b16 %v235
  %v239 = vpack.c.b16 %v237, %v237
  %v240 = vpack.c.b16 %v238, %v238
  %vm243 = vcmask 27648
  %244 = vst.msk [vmem:[%s7] sm:$0xf] %vm243, %v239
  %245 = vst.msk [vmem:[%s7 + $0x4] sm:$0xf] %vm243, %v240
  // Predicated region
  $region30: #{actor_sac_forward.1} parent=0 // pred_check
    _
  $region31: #{actor_sac_forward.1} parent=0 // pred_check_branch
    %247 = sbr.rel (0) target = $region33
  $region32: #{actor_sac_forward.1} parent=0 // pred_region
    _
  $region33: #{actor_sac_forward.1} parent=0 // pred_fallthru
    _
  // Predicated region
  $region34: #{actor_sac_forward.1} parent=0 // pred_check
    _
  $region35: #{actor_sac_forward.1} parent=0 // pred_check_branch
    %249 = sbr.rel (0) target = $region37
  $region36: #{actor_sac_forward.1} parent=0 // pred_region
    _
  $region37: #{actor_sac_forward.1} parent=0 // pred_fallthru
    _

</llo_original>
